<compile_context>
chip_gen: v7x
topology: tpu7x:2x2x1
jax: 0.10.0
libtpu: 0.0.40
codegen_flags: <defaults>
</compile_context>

<pallas_src>
import functools
import math

import jax
import jax.numpy as jnp
from jax.experimental import pallas as pl
from jax.experimental.pallas import tpu as pltpu


# ---------------------------------------------------------------------------
# Kernel 1a: to_qvk projection with K fully resident.
#   x block (B, K), W block (tn, K)  ->  out block (B, tn)
#   1-D grid over N, no accumulator, no init/finalize.
# ---------------------------------------------------------------------------
def _qkv_linear_kernel(x_ref, w_ref, b_ref, o_ref):
    acc = jax.lax.dot_general(
        x_ref[...], w_ref[...],
        dimension_numbers=(((1,), (1,)), ((), ())),   # contract both on K
        preferred_element_type=jnp.float32)
    o_ref[...] = (acc + b_ref[...]).astype(o_ref.dtype)


# ---------------------------------------------------------------------------
# Kernel 1b: K-tiled fallback (only used when L*E is too large for a
# K-resident W tile).  Grid = (N/tn, K/tk), reduction axis last.
# ---------------------------------------------------------------------------
def _qkv_linear_kernel_ktiled(x_ref, w_ref, b_ref, o_ref, acc_ref):
    kk = pl.program_id(1)

    @pl.when(kk == 0)
    def _init():
        acc_ref[...] = jnp.zeros_like(acc_ref)

    acc_ref[...] += jax.lax.dot_general(
        x_ref[...], w_ref[...],
        dimension_numbers=(((1,), (1,)), ((), ())),
        preferred_element_type=jnp.float32)

    @pl.when(kk == pl.num_programs(1) - 1)
    def _finalize():
        o_ref[...] = (acc_ref[...] + b_ref[...]).astype(o_ref.dtype)


# ---------------------------------------------------------------------------
# Kernel 2: multi-head attention, Bb batch elements (all heads) per grid step.
#   qkv block: (Bb, 3, H, L, D)  (head-major thanks to the W permutation)
#   out  block: (Bb, L, E), one dense store per batch element.
# ---------------------------------------------------------------------------
def _attention_kernel(qkv_ref, o_ref, *, block_b, num_heads, seq_len, head_dim):
    Bb, H, L, D = block_b, num_heads, seq_len, head_dim
    inv_sqrt_d = 1.0 / math.sqrt(D)

    qkv = qkv_ref[...]                                   # (Bb, 3, H, L, D) bf16
    # Leading-dim merges only (minor two dims unchanged) -> pure metadata.
    q = qkv[:, 0].reshape(Bb * H, L, D)
    k = qkv[:, 1].reshape(Bb * H, L, D)
    v = qkv[:, 2].reshape(Bb * H, L, D)

    # Head-batched QK^T (no explicit k.T) and softmax on the whole tensor.
    s = jnp.einsum('gid,gjd->gij', q, k,
                   preferred_element_type=jnp.float32)   # (Bb*H, L, L) f32
    m = jnp.max(s, axis=-1, keepdims=True)
    p = jnp.exp(s - m)                                   # unnormalized
    denom = jnp.sum(p, axis=-1, keepdims=True)

    z = jnp.einsum('gij,gjd->gid', p.astype(v.dtype), v,
                   preferred_element_type=jnp.float32)   # (Bb*H, L, D) f32
    # Deferred softmax normalization; the module's post-attention 1/sqrt(D)
    # is folded into the same multiply (EUP reciprocal ~ free slot).
    z = z * (pl.reciprocal(denom, approx=True) * inv_sqrt_d)
    z = z.reshape(Bb, H, L, D)

    # 'h l d -> l (h d)' via lane-axis concatenation, then ONE store per
    # batch element (no per-head masked partial stores).
    for bb in range(Bb):                                 # static; Bb is tiny
        out_bb = jnp.concatenate([z[bb, h] for h in range(H)], axis=-1)
        o_ref[bb] = out_bb.astype(o_ref.dtype)


# ---------------------------------------------------------------------------
# Wrapper helpers.
# ---------------------------------------------------------------------------
def _round_up(x, m):
    return ((x + m - 1) // m) * m


def _largest_tile(dim, cap):
    """Largest multiple of 128 that divides `dim` (a 128-multiple), <= cap."""
    best = 128
    t = 128
    limit = min(cap, dim)
    while t <= limit:
        if dim % t == 0:
            best = t
        t += 128
    return best


def _pick_batch_block(batch, bytes_per_elem, budget=4 << 20):
    """Largest divisor of `batch` whose block fits `budget` while keeping
    at least 2 parallel grid steps (feeds both v7x TensorCores)."""
    if batch <= 1:
        return 1
    best = 1
    for d in range(1, batch + 1):
        if batch % d == 0 and batch // d >= 2 and 2 * d * bytes_per_elem <= budget:
            best = d
    return best


def self_attention_forward(x, w, b, *, max_seq_length, embedding_size,
                           num_heads, tn_target=2048, tk_target=2048):
    """JAX/Pallas port of SelfAttention.forward (same math as the PyTorch module)."""
    B = x.shape[0]
    L, E, H = max_seq_length, embedding_size, num_heads
    assert E % H == 0
    D = E // H
    K_dim = L * E
    N_dim = 3 * L * E

    # --- one-time weight prep (fused row-permute + bf16 cast; load-time cost) ---
    # Permute W / b rows from the module's flat (k, l, d, h) output ordering to
    # (k, h, l, d) so the projection output is already head-major: the einops
    # rearrange 'b (k l d h) -> k b h l d' becomes a free metadata reshape.
    perm = (jnp.arange(N_dim, dtype=jnp.int32)
            .reshape(3, L, D, H)
            .transpose(0, 3, 1, 2)
            .reshape(-1))
    w_p = jnp.take(w, perm, axis=0).astype(jnp.bfloat16)            # (N, K)
    b_p = jnp.take(b, perm, axis=0).astype(jnp.float32).reshape(1, N_dim)
    x_flat = x.reshape(B, K_dim).astype(jnp.bfloat16)               # (B, K)

    # Pad N / K to multiples of 128 so tiles are always aligned and bounded.
    N_pad = _round_up(N_dim, 128)
    K_pad = _round_up(K_dim, 128)
    if K_pad != K_dim:
        x_flat = jnp.pad(x_flat, ((0, 0), (0, K_pad - K_dim)))
        w_p = jnp.pad(w_p, ((0, 0), (0, K_pad - K_dim)))
    if N_pad != N_dim:
        w_p = jnp.pad(w_p, ((0, N_pad - N_dim), (0, 0)))
        b_p = jnp.pad(b_p, ((0, 0), (0, N_pad - N_dim)))

    # --- tile sizing from a VMEM byte budget (v7x has 64 MiB per TC) ---------
    w_tile_budget = 8 << 20                      # bytes per W tile (x2 buffers)
    if 128 * K_pad * 2 <= w_tile_budget:
        tk = K_pad                               # K fully resident
    else:
        tk = _largest_tile(K_pad, max(128, min(tk_target,
                                               w_tile_budget // (2 * 128))))
    tn_cap = min(tn_target, max(128, w_tile_budget // (2 * tk)))
    if N_pad >= 256:
        tn_cap = min(tn_cap, max(128, N_pad // 2))   # >= 2 parallel N steps
    tn = _largest_tile(N_pad, tn_cap)
    k_resident = (tk == K_pad)

    # Right-sized VMEM limit from actual tile bytes (double-buffered) + margin.
    x_b, w_b, b_b, o_b = B * tk * 2, tn * tk * 2, tn * 4, B * tn * 2
    acc_b = 0 if k_resident else B * tn * 4
    needed = 2 * (x_b + w_b + b_b + o_b) + acc_b
    vmem_limit = int(min(32 << 20, max(4 << 20, 2 * needed)))

    # --- Kernel 1: QKV projection (HBM weight-stream bound; MXU M dim = B) ---
    if k_resident:
        qkv = pl.pallas_call(
            _qkv_linear_kernel,
            out_shape=jax.ShapeDtypeStruct((B, N_pad), jnp.bfloat16),
            grid=(N_pad // tn,),
            in_specs=[
                pl.BlockSpec((B, K_pad), lambda j: (0, 0)),      # x resident
                pl.BlockSpec((tn, K_pad), lambda j: (j, 0)),     # W streamed
                pl.BlockSpec((1, tn), lambda j: (0, j)),         # bias
            ],
            out_specs=pl.BlockSpec((B, tn), lambda j: (0, j)),
            compiler_params=pltpu.CompilerParams(
                dimension_semantics=("parallel",),
                vmem_limit_bytes=vmem_limit),
        )(x_flat, w_p, b_p)
    else:
        qkv = pl.pallas_call(
            _qkv_linear_kernel_ktiled,
            out_shape=jax.ShapeDtypeStruct((B, N_pad), jnp.bfloat16),
            grid=(N_pad // tn, K_pad // tk),
            in_specs=[
                pl.BlockSpec((B, tk), lambda j, kk: (0, kk)),
                pl.BlockSpec((tn, tk), lambda j, kk: (j, kk)),
                pl.BlockSpec((1, tn), lambda j, kk: (0, j)),
            ],
            out_specs=pl.BlockSpec((B, tn), lambda j, kk: (0, j)),
            scratch_shapes=[pltpu.VMEM((B, tn), jnp.float32)],
            compiler_params=pltpu.CompilerParams(
                dimension_semantics=("parallel", "arbitrary"),
                vmem_limit_bytes=vmem_limit),
        )(x_flat, w_p, b_p)

    if N_pad != N_dim:
        qkv = qkv[:, :N_dim]
    # Pure metadata reshape: the flat N axis is already (k, h, l, d) ordered.
    qkv5 = qkv.reshape(B, 3, H, L, D)

    # --- Kernel 2: attention, Bb batch elements per grid step ----------------
    bytes_per_elem = 3 * H * L * D * 2 + L * E * 4
    Bb = _pick_batch_block(B, bytes_per_elem)
    attn_kernel = functools.partial(_attention_kernel, block_b=Bb,
                                    num_heads=H, seq_len=L, head_dim=D)
    out = pl.pallas_call(
        attn_kernel,
        out_shape=jax.ShapeDtypeStruct((B, L, E), jnp.float32),
        grid=(B // Bb,),
        in_specs=[pl.BlockSpec((Bb, 3, H, L, D), lambda bi: (bi, 0, 0, 0, 0))],
        out_specs=pl.BlockSpec((Bb, L, E), lambda bi: (bi, 0, 0)),
        compiler_params=pltpu.CompilerParams(
            dimension_semantics=("parallel",)),
    )(qkv5)
    return out


def _reference_forward(x, w, b, *, max_seq_length, embedding_size, num_heads):
    """Pure-JAX f32 port of the PyTorch module (einops rearranges inlined)."""
    B = x.shape[0]
    L, E, H = max_seq_length, embedding_size, num_heads
    D = E // H
    qkv = x.reshape(B, -1).astype(jnp.float32) @ w.astype(jnp.float32).T + b
    qkv = qkv.reshape(B, 3, L, D, H).transpose(1, 0, 4, 2, 3)  # 'b (k l d h) -> k b h l d'
    Q, K_, V = qkv[0], qkv[1], qkv[2]
    scores = jnp.einsum('bhid,bhjd->bhij', Q, K_)
    attn = jax.nn.softmax(scores, axis=-1)
    Z = jnp.einsum('bhij,bhjd->bhid', attn, V) / jnp.sqrt(jnp.float32(D))
    return Z.transpose(0, 2, 1, 3).reshape(B, L, H * D)        # 'b h l d -> b l (h d)'


if __name__ == "__main__":
    # Small shapes consistent with the module: B=2, L=8, E=32, H=4 (D=8).
    B, L, E, H = 2, 8, 32, 4
    key = jax.random.PRNGKey(0)
    kx, kw, kb = jax.random.split(key, 3)

    x = jax.random.normal(kx, (B, L, E), dtype=jnp.float32)

    # nn.Linear(L*E, 3*L*E)-shaped params: weight (3*L*E, L*E), bias (3*L*E,)
    fan_in = L * E
    bound = 1.0 / math.sqrt(fan_in)
    w = jax.random.uniform(kw, (3 * L * E, L * E), minval=-bound, maxval=bound,
                           dtype=jnp.float32)
    b = jax.random.uniform(kb, (3 * L * E,), minval=-bound, maxval=bound,
                           dtype=jnp.float32)

    fwd = jax.jit(functools.partial(self_attention_forward, max_seq_length=L,
                                    embedding_size=E, num_heads=H))
    out = jax.block_until_ready(fwd(x, w, b))
    assert out.shape == (B, L, E), out.shape
    assert out.dtype == jnp.float32, out.dtype

    # Structural correctness check against a pure-JAX port of the module,
    # evaluated on the same bf16-quantized x / W that the kernels consume
    # (isolates layout/permutation/softmax correctness from bf16 rounding).
    x_q = x.astype(jnp.bfloat16).astype(jnp.float32)
    w_q = w.astype(jnp.bfloat16).astype(jnp.float32)
    ref = _reference_forward(x_q, w_q, b, max_seq_length=L,
                             embedding_size=E, num_heads=H)
    err = float(jnp.max(jnp.abs(out - ref)))
    assert err < 4e-2, f"max abs error vs reference: {err}"

    print("KERNEL_OK")
</pallas_src>

<mosaic_0001>
module attributes {stable_mosaic.version = 11 : i64} {
  func.func @_qkv_linear_kernel(%arg0: i32, %arg1: memref<2x256xbf16, #tpu.memory_space<vmem>>, %arg2: memref<384x256xbf16, #tpu.memory_space<vmem>>, %arg3: memref<1x384xf32, #tpu.memory_space<vmem>>, %arg4: memref<2x384xbf16, #tpu.memory_space<vmem>>) attributes {dimension_semantics = [#tpu.dimension_semantics<parallel>], iteration_bounds = array<i64: 2>, scalar_prefetch = 0 : i64, scratch_operands = 0 : i64, tpu.core_type = #tpu.core_type<tc>, window_params = [{pipeline_mode = #tpu.pipeline_mode<synchronous>, transform_indices = @transform_0, window_bounds = array<i64: 2, 256>}, {transform_indices = @transform_1, window_bounds = array<i64: 384, 256>}, {transform_indices = @transform_2, window_bounds = array<i64: 1, 384>}, {transform_indices = @transform_3, window_bounds = array<i64: 2, 384>}]} {
    %c0 = arith.constant 0 : index
    %c0_0 = arith.constant 0 : index
    %0 = vector.load %arg1[%c0, %c0_0] : memref<2x256xbf16, #tpu.memory_space<vmem>>, vector<2x256xbf16>
    %c0_1 = arith.constant 0 : index
    %c0_2 = arith.constant 0 : index
    %1 = vector.load %arg2[%c0_1, %c0_2] : memref<384x256xbf16, #tpu.memory_space<vmem>>, vector<384x256xbf16>
    %cst = arith.constant dense<0.000000e+00> : vector<2x384xf32>
    %2 = tpu.matmul %0, %1, %cst {dimension_numbers = #tpu.dot_dimension_numbers<[1], [1], [0], [0], [0, 0, 1, 0], [], []>} : vector<2x256xbf16>, vector<384x256xbf16>, vector<2x384xf32> -> vector<2x384xf32>
    %c0_3 = arith.constant 0 : index
    %c0_4 = arith.constant 0 : index
    %3 = vector.load %arg3[%c0_3, %c0_4] : memref<1x384xf32, #tpu.memory_space<vmem>>, vector<1x384xf32>
    %4 = vector.broadcast %3 : vector<1x384xf32> to vector<2x384xf32>
    %5 = arith.addf %2, %4 : vector<2x384xf32>
    %6 = arith.truncf %5 : vector<2x384xf32> to vector<2x384xbf16>
    %c0_5 = arith.constant 0 : index
    %c0_6 = arith.constant 0 : index
    %7 = vector.load %arg4[%c0_5, %c0_6] : memref<2x384xbf16, #tpu.memory_space<vmem>>, vector<2x384xbf16>
    tpu.vector_store %arg4[%c0_5, %c0_6], %6 {strides = array<i32>} : memref<2x384xbf16, #tpu.memory_space<vmem>>, vector<2x384xbf16>,
    return
  }
  func.func @transform_0(%arg0: i32) -> (i32, i32) {
    %c0_i32 = arith.constant 0 : i32
    %c0_i32_0 = arith.constant 0 : i32
    %c0_i32_1 = arith.constant 0 : i32
    return %c0_i32, %c0_i32_0 : i32, i32
  }
  func.func @transform_1(%arg0: i32) -> (i32, i32) {
    %c0_i32 = arith.constant 0 : i32
    %c0_i32_0 = arith.constant 0 : i32
    return %arg0, %c0_i32 : i32, i32
  }
  func.func @transform_2(%arg0: i32) -> (i32, i32) {
    %c0_i32 = arith.constant 0 : i32
    %c0_i32_0 = arith.constant 0 : i32
    return %c0_i32, %arg0 : i32, i32
  }
  func.func @transform_3(%arg0: i32) -> (i32, i32) {
    %c0_i32 = arith.constant 0 : i32
    %c0_i32_0 = arith.constant 0 : i32
    return %c0_i32, %arg0 : i32, i32
  }
}

module attributes {stable_mosaic.version = 11 : i64} {
  func.func @_attention_kernel(%arg0: i32, %arg1: memref<1x3x4x8x8xbf16, #tpu.memory_space<vmem>>, %arg2: memref<1x8x32xf32, #tpu.memory_space<vmem>>) attributes {dimension_semantics = [#tpu.dimension_semantics<parallel>], iteration_bounds = array<i64: 2>, scalar_prefetch = 0 : i64, scratch_operands = 0 : i64, tpu.core_type = #tpu.core_type<tc>, window_params = [{transform_indices = @transform_0, window_bounds = array<i64: 1, 3, 4, 8, 8>}, {transform_indices = @transform_1, window_bounds = array<i64: 1, 8, 32>}]} {
    %c0 = arith.constant 0 : index
    %c0_0 = arith.constant 0 : index
    %c0_1 = arith.constant 0 : index
    %c0_2 = arith.constant 0 : index
    %c0_3 = arith.constant 0 : index
    %0 = vector.load %arg1[%c0, %c0_0, %c0_1, %c0_2, %c0_3] : memref<1x3x4x8x8xbf16, #tpu.memory_space<vmem>>, vector<1x3x4x8x8xbf16>
    %1 = vector.extract_strided_slice %0 {offsets = [0, 0, 0, 0, 0], sizes = [1, 1, 4, 8, 8], strides = [1, 1, 1, 1, 1]} : vector<1x3x4x8x8xbf16> to vector<1x1x4x8x8xbf16>
    %2 = vector.shape_cast %1 : vector<1x1x4x8x8xbf16> to vector<1x4x8x8xbf16>
    %3 = vector.shape_cast %2 : vector<1x4x8x8xbf16> to vector<4x8x8xbf16>
    %4 = vector.extract_strided_slice %0 {offsets = [0, 1, 0, 0, 0], sizes = [1, 1, 4, 8, 8], strides = [1, 1, 1, 1, 1]} : vector<1x3x4x8x8xbf16> to vector<1x1x4x8x8xbf16>
    %5 = vector.shape_cast %4 : vector<1x1x4x8x8xbf16> to vector<1x4x8x8xbf16>
    %6 = vector.shape_cast %5 : vector<1x4x8x8xbf16> to vector<4x8x8xbf16>
    %7 = vector.extract_strided_slice %0 {offsets = [0, 2, 0, 0, 0], sizes = [1, 1, 4, 8, 8], strides = [1, 1, 1, 1, 1]} : vector<1x3x4x8x8xbf16> to vector<1x1x4x8x8xbf16>
    %8 = vector.shape_cast %7 : vector<1x1x4x8x8xbf16> to vector<1x4x8x8xbf16>
    %9 = vector.shape_cast %8 : vector<1x4x8x8xbf16> to vector<4x8x8xbf16>
    "tpu.trace_start"() <{level = 10 : i32, message = "gid,gjd->gij"}> : () -> ()
    %cst = arith.constant dense<0.000000e+00> : vector<4x8x8xf32>
    %10 = tpu.matmul %3, %6, %cst {dimension_numbers = #tpu.dot_dimension_numbers<[2], [2], [1], [1], [0, 0, 0, 1, 1, 1], [0], [0]>} : vector<4x8x8xbf16>, vector<4x8x8xbf16>, vector<4x8x8xf32> -> vector<4x8x8xf32>
    "tpu.trace_stop"() : () -> ()
    %cst_4 = arith.constant dense<0xFF800000> : vector<4x8xf32>
    %11 = vector.multi_reduction <maximumf>, %10, %cst_4 [2] : vector<4x8x8xf32> to vector<4x8xf32>
    %12 = vector.shape_cast %11 : vector<4x8xf32> to vector<4x8x1xf32>
    %13 = vector.broadcast %12 : vector<4x8x1xf32> to vector<4x8x8xf32>
    %14 = arith.subf %10, %13 : vector<4x8x8xf32>
    %15 = math.exp %14 : vector<4x8x8xf32>
    %cst_5 = arith.constant dense<0.000000e+00> : vector<4x8xf32>
    %16 = vector.multi_reduction <add>, %15, %cst_5 [2] : vector<4x8x8xf32> to vector<4x8xf32>
    %17 = vector.shape_cast %16 : vector<4x8xf32> to vector<4x8x1xf32>
    %18 = arith.truncf %15 : vector<4x8x8xf32> to vector<4x8x8xbf16>
    "tpu.trace_start"() <{level = 10 : i32, message = "gij,gjd->gid"}> : () -> ()
    %cst_6 = arith.constant dense<0.000000e+00> : vector<4x8x8xf32>
    %19 = tpu.matmul %18, %9, %cst_6 {dimension_numbers = #tpu.dot_dimension_numbers<[2], [1], [1], [2], [0, 0, 0, 1, 1, 2], [0], [0]>} : vector<4x8x8xbf16>, vector<4x8x8xbf16>, vector<4x8x8xf32> -> vector<4x8x8xf32>
    "tpu.trace_stop"() : () -> ()
    %20 = tpu.reciprocal %17 {approx = true} : vector<4x8x1xf32> -> vector<4x8x1xf32>
    %cst_7 = arith.constant 0.353553385 : f32
    %21 = vector.broadcast %cst_7 : f32 to vector<4x8x1xf32>
    %22 = arith.mulf %20, %21 : vector<4x8x1xf32>
    %23 = vector.broadcast %22 : vector<4x8x1xf32> to vector<4x8x8xf32>
    %24 = arith.mulf %19, %23 : vector<4x8x8xf32>
    %25 = vector.shape_cast %24 : vector<4x8x8xf32> to vector<1x4x8x8xf32>
    %26 = vector.extract_strided_slice %25 {offsets = [0, 0, 0, 0], sizes = [1, 1, 8, 8], strides = [1, 1, 1, 1]} : vector<1x4x8x8xf32> to vector<1x1x8x8xf32>
    %27 = vector.shape_cast %26 : vector<1x1x8x8xf32> to vector<8x8xf32>
    %28 = vector.extract_strided_slice %25 {offsets = [0, 1, 0, 0], sizes = [1, 1, 8, 8], strides = [1, 1, 1, 1]} : vector<1x4x8x8xf32> to vector<1x1x8x8xf32>
    %29 = vector.shape_cast %28 : vector<1x1x8x8xf32> to vector<8x8xf32>
    %30 = vector.extract_strided_slice %25 {offsets = [0, 2, 0, 0], sizes = [1, 1, 8, 8], strides = [1, 1, 1, 1]} : vector<1x4x8x8xf32> to vector<1x1x8x8xf32>
    %31 = vector.shape_cast %30 : vector<1x1x8x8xf32> to vector<8x8xf32>
    %32 = vector.extract_strided_slice %25 {offsets = [0, 3, 0, 0], sizes = [1, 1, 8, 8], strides = [1, 1, 1, 1]} : vector<1x4x8x8xf32> to vector<1x1x8x8xf32>
    %33 = vector.shape_cast %32 : vector<1x1x8x8xf32> to vector<8x8xf32>
    %34 = tpu.concatenate %27, %29, %31, %33 in 1 : vector<8x8xf32>, vector<8x8xf32>, vector<8x8xf32>, vector<8x8xf32> -> vector<8x32xf32>
    %c0_8 = arith.constant 0 : index
    %c0_9 = arith.constant 0 : index
    %c0_10 = arith.constant 0 : index
    %35 = vector.load %arg2[%c0_8, %c0_9, %c0_10] : memref<1x8x32xf32, #tpu.memory_space<vmem>>, vector<1x8x32xf32>
    %36 = vector.shape_cast %35 : vector<1x8x32xf32> to vector<8x32xf32>
    %37 = vector.shape_cast %34 : vector<8x32xf32> to vector<1x8x32xf32>
    tpu.vector_store %arg2[%c0_8, %c0_9, %c0_10], %37 {strides = array<i32>} : memref<1x8x32xf32, #tpu.memory_space<vmem>>, vector<1x8x32xf32>,
    return
  }
  func.func @transform_0(%arg0: i32) -> (i32, i32, i32, i32, i32) {
    %c0_i32 = arith.constant 0 : i32
    %c0_i32_0 = arith.constant 0 : i32
    %c0_i32_1 = arith.constant 0 : i32
    %c0_i32_2 = arith.constant 0 : i32
    %c0_i32_3 = arith.constant 0 : i32
    return %arg0, %c0_i32, %c0_i32_0, %c0_i32_1, %c0_i32_2 : i32, i32, i32, i32, i32
  }
  func.func @transform_1(%arg0: i32) -> (i32, i32, i32) {
    %c0_i32 = arith.constant 0 : i32
    %c0_i32_0 = arith.constant 0 : i32
    %c0_i32_1 = arith.constant 0 : i32
    return %arg0, %c0_i32, %c0_i32_0 : i32, i32, i32
  }
}

</mosaic_0001>

<llo_original>
// kernel: self_attention_forward.2
$region0: #{self_attention_forward.2}
  #allocation0 [shape = 'u32[]', space=smem, size = 0x4, offset = 0x4, fixed_abs, tag = 'smem constant byte address 0x4 - core index']
  #allocation1 [shape = 'u32[144,128]{1,0:T(1,128)}', space=vmem, size = 0x12000, scoped, tag = 'internal scratch']
  %s0 = inlined_call_operand.vmem [shape: bf16[2,256], index: 0, kind: input, shape index: {}]
  %s1 = inlined_call_operand.vmem [shape: bf16[768,256], index: 1, kind: input, shape index: {}]
  %s2 = inlined_call_operand.vmem [shape: f32[1,768], index: 2, kind: input, shape index: {}]
  %s3 = inlined_call_operand.vmem [shape: bf16[2,768], index: 3, kind: output, shape index: {}]
  %s4 = sld [smem:[#allocation0]]
  $region45: #{self_attention_forward.2} parent=0
    _
  %s6 = ssub.s32 1, %s4
  %s7 = scalar_select 0, %s6, %s4
  loop: start=0, step=1, limit=4
  $region2: #{self_attention_forward.2} parent=0 // loop_pre_header
    _
  $region3: #{self_attention_forward.2} parent=0 // loop_header
    %s9 = sphi 0, %s13
    %p10 = scmp.ge.s32.totalorder %s9, 4
    %s17 = sphi 0, %s17
    %s19 = sphi 0, %s17
    %s20 = sphi 0, %s19
    %s34 = sphi 0, %s20
    %s40 = sphi 0, %s42
    %s43 = sphi 0, %s40
    %s44 = sphi 0, %s43
    %s60 = sphi 0, %s44
    %s66 = sphi 0, %s68
    %s69 = sphi 0, %s66
    %s70 = sphi 0, %s69
    %s86 = sphi 0, %s70
    %s92 = sphi 0, %s94
    %s95 = sphi 0, %s92
    %s96 = sphi 0, %s95
    %s112 = sphi 0, %s96
  $region4: #{self_attention_forward.2} parent=0 // loop_header_branch
    %12 = sbr.rel (%p10) target = $region8
  $region5: #{self_attention_forward.2} parent=0 // loop_body
    %s14 = ssub.s32 %s9, 1
    %s15 = ssub.s32 %s9, 2
    %s16 = sadd.s32 %s9, 1
    %s18 = sadd.s32 %s17, 1
    %p21 = scmp.eq.s32.totalorder %s9, 1
    %p22 = scmp.ne.s32.totalorder %s17, %s19
    %p23 = scmp.eq.s32.totalorder %s9, 0
    %p24 = por %p22, %p23
    %p25 = scmp.ne.s32.totalorder %s17, %s19
    %p26 = scmp.eq.s32.totalorder %s14, 1
    %p27 = por %p25, %p26
    %p28 = scmp.ne.s32.totalorder %s19, %s20
    %p29 = scmp.eq.s32.totalorder %s14, 0
    %p30 = por %p28, %p29
    %p31 = scmp.ne.s32.totalorder %s19, %s20
    %p32 = scmp.eq.s32.totalorder %s15, 1
    %p33 = por %p31, %p32
    %p35 = scmp.ne.s32.totalorder %s20, %s34
    %p36 = scmp.eq.s32.totalorder %s15, 0
    %p37 = por %p35, %p36
    %s38 = ssub.s32 %s9, %s16
    %p39 = scmp.eq.s32.totalorder %s38, 0
    %s41 = sadd.s32 %s40, 1
    %s42 = scalar_select %p39, %s40, %s41
    %p45 = pneg %p39
    %p46 = scmp.eq.s32.totalorder %s9, 1
    %p47 = por %p45, %p46
    %p48 = scmp.ne.s32.totalorder %s40, %s43
    %p49 = scmp.eq.s32.totalorder %s9, 0
    %p50 = por %p48, %p49
    %p51 = scmp.ne.s32.totalorder %s40, %s43
    %p52 = scmp.eq.s32.totalorder %s14, 1
    %p53 = por %p51, %p52
    %p54 = scmp.ne.s32.totalorder %s43, %s44
    %p55 = scmp.eq.s32.totalorder %s14, 0
    %p56 = por %p54, %p55
    %p57 = scmp.ne.s32.totalorder %s43, %s44
    %p58 = scmp.eq.s32.totalorder %s15, 1
    %p59 = por %p57, %p58
    %p61 = scmp.ne.s32.totalorder %s44, %s60
    %p62 = scmp.eq.s32.totalorder %s15, 0
    %p63 = por %p61, %p62
    %s64 = ssub.s32 %s9, %s16
    %p65 = scmp.eq.s32.totalorder %s64, 0
    %s67 = sadd.s32 %s66, 1
    %s68 = scalar_select %p65, %s66, %s67
    %p71 = pneg %p65
    %p72 = scmp.eq.s32.totalorder %s9, 1
    %p73 = por %p71, %p72
    %p74 = scmp.ne.s32.totalorder %s66, %s69
    %p75 = scmp.eq.s32.totalorder %s9, 0
    %p76 = por %p74, %p75
    %p77 = scmp.ne.s32.totalorder %s66, %s69
    %p78 = scmp.eq.s32.totalorder %s14, 1
    %p79 = por %p77, %p78
    %p80 = scmp.ne.s32.totalorder %s69, %s70
    %p81 = scmp.eq.s32.totalorder %s14, 0
    %p82 = por %p80, %p81
    %p83 = scmp.ne.s32.totalorder %s69, %s70
    %p84 = scmp.eq.s32.totalorder %s15, 1
    %p85 = por %p83, %p84
    %p87 = scmp.ne.s32.totalorder %s70, %s86
    %p88 = scmp.eq.s32.totalorder %s15, 0
    %p89 = por %p87, %p88
    %s90 = ssub.s32 %s9, %s16
    %p91 = scmp.eq.s32.totalorder %s90, 0
    %s93 = sadd.s32 %s92, 1
    %s94 = scalar_select %p91, %s92, %s93
    %p97 = pneg %p91
    %p98 = scmp.eq.s32.totalorder %s9, 1
    %p99 = por %p97, %p98
    %p100 = scmp.ne.s32.totalorder %s92, %s95
    %p101 = scmp.eq.s32.totalorder %s9, 0
    %p102 = por %p100, %p101
    %p103 = scmp.ne.s32.totalorder %s92, %s95
    %p104 = scmp.eq.s32.totalorder %s14, 1
    %p105 = por %p103, %p104
    %p106 = scmp.ne.s32.totalorder %s95, %s96
    %p107 = scmp.eq.s32.totalorder %s14, 0
    %p108 = por %p106, %p107
    %p109 = scmp.ne.s32.totalorder %s95, %s96
    %p110 = scmp.eq.s32.totalorder %s15, 1
    %p111 = por %p109, %p110
    %p113 = scmp.ne.s32.totalorder %s96, %s112
    %p114 = scmp.eq.s32.totalorder %s15, 0
    %p115 = por %p113, %p114
    %p116 = scmp.le.s32.totalorder 1, %s9
    %p117 = scmp.lt.s32.totalorder %s9, 3
    %p118 = pnand %p116, %p117
    %p119 = pneg %p118
    // Predicated region
    $region9: #{self_attention_forward.2} parent=5 // pred_check
      _
    $region10: #{self_attention_forward.2} parent=5 // pred_check_branch
      %121 = sbr.rel (%p118) target = $region12
    $region11: #{self_attention_forward.2} parent=5 // pred_region
      %s122 = ssub.s32 %s9, 1
      // Predicated region
      $region13: #{self_attention_forward.2} parent=11 // pred_check
        %p123 = pneg %p30
      $region14: #{self_attention_forward.2} parent=11 // pred_check_branch
        %125 = sbr.rel (%p123) target = $region16
      $region15: #{self_attention_forward.2} parent=11 // pred_region
        _
      $region16: #{self_attention_forward.2} parent=11 // pred_fallthru
        _
    $region12: #{self_attention_forward.2} parent=5 // pred_fallthru
      _
    %p126 = scmp.lt.s32.totalorder %s9, 2
    // Predicated region
    $region17: #{self_attention_forward.2} parent=5 // pred_check
      %p127 = pneg %p126
    $region18: #{self_attention_forward.2} parent=5 // pred_check_branch
      %129 = sbr.rel (%p127) target = $region20
    $region19: #{self_attention_forward.2} parent=5 // pred_region
      // Predicated region
      $region21: #{self_attention_forward.2} parent=19 // pred_check
        %p130 = pneg %p50
      $region22: #{self_attention_forward.2} parent=19 // pred_check_branch
        %132 = sbr.rel (%p130) target = $region24
      $region23: #{self_attention_forward.2} parent=19 // pred_region
        %s133 = smul.u32 48, %s9
        %p134 = scmp.lt.s32.totalorder %s133, 95
        %s135 = scalar_select %p134, %s133, 95
        %s136 = smul.addr %s135, 2
        %s137 = smul.addr %s136, 4
        %s138 = scalar_lea.vmem %s1, %s137
        %s139 = smul.u32 48, %s9
      $region24: #{self_attention_forward.2} parent=19 // pred_fallthru
        _
      // Predicated region
      $region25: #{self_attention_forward.2} parent=19 // pred_check
        %p140 = pneg %p76
      $region26: #{self_attention_forward.2} parent=19 // pred_check_branch
        %142 = sbr.rel (%p140) target = $region28
      $region27: #{self_attention_forward.2} parent=19 // pred_region
        %s143 = smul.u32 3, %s9
        %p144 = scmp.lt.s32.totalorder %s143, 5
        %s145 = scalar_select %p144, %s143, 5
        %s146 = scalar_lea.vmem %s2, %s145
        %s147 = smul.u32 3, %s9
      $region28: #{self_attention_forward.2} parent=19 // pred_fallthru
        _
    $region20: #{self_attention_forward.2} parent=5 // pred_fallthru
      _
    %p148 = scmp.le.s32.totalorder 1, %s9
    %p149 = scmp.lt.s32.totalorder %s9, 3
    %p150 = pnand %p148, %p149
    %p151 = pneg %p150
    // Predicated region
    $region29: #{self_attention_forward.2} parent=5 // pred_check
      _
    $region30: #{self_attention_forward.2} parent=5 // pred_check_branch
      %153 = sbr.rel (%p150) target = $region32
    $region31: #{self_attention_forward.2} parent=5 // pred_region
      %s154 = ssub.s32 %s9, 1
      %p155 = pneg %p30
      %p156 = pneg %p27
      %s157 = smul.u32 48, %s14
      %p158 = scmp.lt.s32.totalorder %s157, 95
      %s159 = scalar_select %p158, %s157, 95
      %s160 = smul.addr %s159, 2
      %s161 = smul.addr %s160, 4
      %s162 = scalar_lea.vmem %s1, %s161
      %p163 = pneg %p56
      %p164 = pneg %p53
      %s165 = smul.u32 3, %s14
      %p166 = scmp.lt.s32.totalorder %s165, 5
      %s167 = scalar_select %p166, %s165, 5
      %s168 = scalar_lea.vmem %s2, %s167
      %p169 = pneg %p82
      %p170 = pneg %p79
      %p171 = pneg %p108
      %p172 = pneg %p105
      %s173 = smul.u32 3, %s14
      %p174 = scmp.lt.s32.totalorder %s173, 5
      %s175 = scalar_select %p174, %s173, 5
      %s176 = scalar_lea.vmem %s3, %s175
      %s177 = smul.u32 48, %s14
      %p178 = scmp.lt.s32.totalorder %s177, 95
      %s179 = scalar_select %p178, %s177, 95
      %s180 = smul.addr %s179, 2
      %s181 = smul.addr %s180, 4
      %s182 = scalar_lea.vmem %s1, %s181
      %s183 = smul.u32 48, %s14
      %s184 = smul.u32 3, %s14
      %p185 = scmp.lt.s32.totalorder %s184, 5
      %s186 = scalar_select %p185, %s184, 5
      %s187 = scalar_lea.vmem %s2, %s186
      %s188 = smul.u32 3, %s14
      %s189 = smul.u32 3, %s14
      %p190 = scmp.lt.s32.totalorder %s189, 5
      %s191 = scalar_select %p190, %s189, 5
      %s192 = scalar_lea.vmem %s3, %s191
      %s193 = smul.u32 3, %s14
      %v195 = vld [vmem:[%s0] sm:$0x3]
      %v196 = vld [vmem:[%s182] sm:$0xff]
      %v197 = vld [vmem:[%s182 + $0x8] sm:$0xff]
      %v198 = vld [vmem:[%s182 + $0x10] sm:$0xff]
      %v199 = vld [vmem:[%s182 + $0x18] sm:$0xff]
      %v200 = vld [vmem:[%s182 + $0x20] sm:$0xff]
      %v201 = vld [vmem:[%s182 + $0x28] sm:$0xff]
      %v202 = vld [vmem:[%s182 + $0x30] sm:$0xff]
      %v203 = vld [vmem:[%s182 + $0x38] sm:$0xff]
      %v204 = vld [vmem:[%s182 + $0x40] sm:$0xff]
      %v205 = vld [vmem:[%s182 + $0x48] sm:$0xff]
      %v206 = vld [vmem:[%s182 + $0x50] sm:$0xff]
      %v207 = vld [vmem:[%s182 + $0x58] sm:$0xff]
      %v208 = vld [vmem:[%s182 + $0x60] sm:$0xff]
      %v209 = vld [vmem:[%s182 + $0x68] sm:$0xff]
      %v210 = vld [vmem:[%s182 + $0x70] sm:$0xff]
      %v211 = vld [vmem:[%s182 + $0x78] sm:$0xff]
      %v212 = vld [vmem:[%s182 + $0x80] sm:$0xff]
      %v213 = vld [vmem:[%s182 + $0x88] sm:$0xff]
      %v214 = vld [vmem:[%s182 + $0x90] sm:$0xff]
      %v215 = vld [vmem:[%s182 + $0x98] sm:$0xff]
      %v216 = vld [vmem:[%s182 + $0xa0] sm:$0xff]
      %v217 = vld [vmem:[%s182 + $0xa8] sm:$0xff]
      %v218 = vld [vmem:[%s182 + $0xb0] sm:$0xff]
      %v219 = vld [vmem:[%s182 + $0xb8] sm:$0xff]
      %v220 = vld [vmem:[%s182 + $0xc0] sm:$0xff]
      %v221 = vld [vmem:[%s182 + $0xc8] sm:$0xff]
      %v222 = vld [vmem:[%s182 + $0xd0] sm:$0xff]
      %v223 = vld [vmem:[%s182 + $0xd8] sm:$0xff]
      %v224 = vld [vmem:[%s182 + $0xe0] sm:$0xff]
      %v225 = vld [vmem:[%s182 + $0xe8] sm:$0xff]
      %v226 = vld [vmem:[%s182 + $0xf0] sm:$0xff]
      %v227 = vld [vmem:[%s182 + $0xf8] sm:$0xff]
      %v228 = vld [vmem:[%s182 + $0x100] sm:$0xff]
      %v229 = vld [vmem:[%s182 + $0x108] sm:$0xff]
      %v230 = vld [vmem:[%s182 + $0x110] sm:$0xff]
      %v231 = vld [vmem:[%s182 + $0x118] sm:$0xff]
      %v232 = vld [vmem:[%s182 + $0x120] sm:$0xff]
      %v233 = vld [vmem:[%s182 + $0x128] sm:$0xff]
      %v234 = vld [vmem:[%s182 + $0x130] sm:$0xff]
      %v235 = vld [vmem:[%s182 + $0x138] sm:$0xff]
      %v236 = vld [vmem:[%s182 + $0x140] sm:$0xff]
      %v237 = vld [vmem:[%s182 + $0x148] sm:$0xff]
      %v238 = vld [vmem:[%s182 + $0x150] sm:$0xff]
      %v239 = vld [vmem:[%s182 + $0x158] sm:$0xff]
      %v240 = vld [vmem:[%s182 + $0x160] sm:$0xff]
      %v241 = vld [vmem:[%s182 + $0x168] sm:$0xff]
      %v242 = vld [vmem:[%s182 + $0x170] sm:$0xff]
      %v243 = vld [vmem:[%s182 + $0x178] sm:$0xff]
      %v244 = vld [vmem:[%s187] sm:$0x7]
      %v246 = vlaneseq
      %v247 = vshrl.u32 %v246, 7
      %v248 = vsub.s32 0, %v247
      %v249 = vrot.slane %v244, %v248
      %v250 = vlaneseq
      %v251 = vshrl.u32 %v250, 7
      %v252 = vsub.s32 1, %v251
      %v253 = vrot.slane %v244, %v252
      %v254 = vlaneseq
      %v255 = vshrl.u32 %v254, 7
      %v256 = vsub.s32 2, %v255
      %v257 = vrot.slane %v244, %v256
      %v263 = vunpack.c.l.s4 1966171168
      %v264 = vunpack.c.0.s8 %v263
      %v265 = vlaneseq
      %v266 = vshrl.u32 %v265, 7
      %v267 = vsub.s32 %v264, %v266
      %v268 = vrot.slane %v195, %v267
      %v269 = vcombine.high %v268, %v268
      %v271 = vunpack.c.l.s4 1966171168
      %v272 = vunpack.c.0.s8 %v271
      %v273 = vlaneseq
      %v274 = vshrl.u32 %v273, 7
      %v275 = vsub.s32 %v272, %v274
      %v276 = vrot.slane %v268, %v275
      %v278 = vunpack.c.l.s4 1966171168
      %v279 = vunpack.c.0.s8 %v278
      %v280 = vlaneseq
      %v281 = vshrl.u32 %v280, 7
      %v282 = vsub.s32 %v279, %v281
      %v283 = vrot.slane %v269, %v282
      %v334 = vunpack.c.l.b16 %v196
      %v335 = vunpack.c.h.b16 %v196
      %v336 = vunpack.c.l.b16 %v197
      %v337 = vunpack.c.h.b16 %v197
      %v338 = vunpack.c.l.b16 %v198
      %v339 = vunpack.c.h.b16 %v198
      %v340 = vunpack.c.l.b16 %v199
      %v341 = vunpack.c.h.b16 %v199
      %v342 = vunpack.c.l.b16 %v200
      %v343 = vunpack.c.h.b16 %v200
      %v344 = vunpack.c.l.b16 %v201
      %v345 = vunpack.c.h.b16 %v201
      %v346 = vunpack.c.l.b16 %v202
      %v347 = vunpack.c.h.b16 %v202
      %v348 = vunpack.c.l.b16 %v203
      %v349 = vunpack.c.h.b16 %v203
      %v350 = vunpack.c.l.b16 %v204
      %v351 = vunpack.c.h.b16 %v204
      %v352 = vunpack.c.l.b16 %v205
      %v353 = vunpack.c.h.b16 %v205
      %v354 = vunpack.c.l.b16 %v206
      %v355 = vunpack.c.h.b16 %v206
      %v356 = vunpack.c.l.b16 %v207
      %v357 = vunpack.c.h.b16 %v207
      %v358 = vunpack.c.l.b16 %v208
      %v359 = vunpack.c.h.b16 %v208
      %v360 = vunpack.c.l.b16 %v209
      %v361 = vunpack.c.h.b16 %v209
      %v362 = vunpack.c.l.b16 %v210
      %v363 = vunpack.c.h.b16 %v210
      %v364 = vunpack.c.l.b16 %v211
      %v365 = vunpack.c.h.b16 %v211
      %v366 = vunpack.c.l.b16 %v212
      %v367 = vunpack.c.h.b16 %v212
      %v368 = vunpack.c.l.b16 %v213
      %v369 = vunpack.c.h.b16 %v213
      %v370 = vunpack.c.l.b16 %v214
      %v371 = vunpack.c.h.b16 %v214
      %v372 = vunpack.c.l.b16 %v215
      %v373 = vunpack.c.h.b16 %v215
      %v374 = vunpack.c.l.b16 %v216
      %v375 = vunpack.c.h.b16 %v216
      %v376 = vunpack.c.l.b16 %v217
      %v377 = vunpack.c.h.b16 %v217
      %v378 = vunpack.c.l.b16 %v218
      %v379 = vunpack.c.h.b16 %v218
      %v380 = vunpack.c.l.b16 %v219
      %v381 = vunpack.c.h.b16 %v219
      %v382 = vunpack.c.l.b16 %v220
      %v383 = vunpack.c.h.b16 %v220
      %v384 = vunpack.c.l.b16 %v221
      %v385 = vunpack.c.h.b16 %v221
      %v386 = vunpack.c.l.b16 %v222
      %v387 = vunpack.c.h.b16 %v222
      %v388 = vunpack.c.l.b16 %v223
      %v389 = vunpack.c.h.b16 %v223
      %v390 = vunpack.c.l.b16 %v224
      %v391 = vunpack.c.h.b16 %v224
      %v392 = vunpack.c.l.b16 %v225
      %v393 = vunpack.c.h.b16 %v225
      %v394 = vunpack.c.l.b16 %v226
      %v395 = vunpack.c.h.b16 %v226
      %v396 = vunpack.c.l.b16 %v227
      %v397 = vunpack.c.h.b16 %v227
      %v398 = vunpack.c.l.b16 %v228
      %v399 = vunpack.c.h.b16 %v228
      %v400 = vunpack.c.l.b16 %v229
      %v401 = vunpack.c.h.b16 %v229
      %v402 = vunpack.c.l.b16 %v230
      %v403 = vunpack.c.h.b16 %v230
      %v404 = vunpack.c.l.b16 %v231
      %v405 = vunpack.c.h.b16 %v231
      %v406 = vunpack.c.l.b16 %v232
      %v407 = vunpack.c.h.b16 %v232
      %v408 = vunpack.c.l.b16 %v233
      %v409 = vunpack.c.h.b16 %v233
      %v410 = vunpack.c.l.b16 %v234
      %v411 = vunpack.c.h.b16 %v234
      %v412 = vunpack.c.l.b16 %v235
      %v413 = vunpack.c.h.b16 %v235
      %v414 = vunpack.c.l.b16 %v236
      %v415 = vunpack.c.h.b16 %v236
      %v416 = vunpack.c.l.b16 %v237
      %v417 = vunpack.c.h.b16 %v237
      %v418 = vunpack.c.l.b16 %v238
      %v419 = vunpack.c.h.b16 %v238
      %v420 = vunpack.c.l.b16 %v239
      %v421 = vunpack.c.h.b16 %v239
      %v422 = vunpack.c.l.b16 %v240
      %v423 = vunpack.c.h.b16 %v240
      %v424 = vunpack.c.l.b16 %v241
      %v425 = vunpack.c.h.b16 %v241
      %v426 = vunpack.c.l.b16 %v242
      %v427 = vunpack.c.h.b16 %v242
      %v428 = vunpack.c.l.b16 %v243
      %v429 = vunpack.c.h.b16 %v243
      %v430 = vpack.c.b16 %v336, %v334
      %v431 = vpack.c.b16 %v337, %v335
      %v432 = vpack.c.b16 %v340, %v338
      %v433 = vpack.c.b16 %v341, %v339
      %v434 = vpack.c.b16 %v344, %v342
      %v435 = vpack.c.b16 %v345, %v343
      %v436 = vpack.c.b16 %v348, %v346
      %v437 = vpack.c.b16 %v349, %v347
      %v438 = vpack.c.b16 %v352, %v350
      %v439 = vpack.c.b16 %v353, %v351
      %v440 = vpack.c.b16 %v356, %v354
      %v441 = vpack.c.b16 %v357, %v355
      %v442 = vpack.c.b16 %v360, %v358
      %v443 = vpack.c.b16 %v361, %v359
      %v444 = vpack.c.b16 %v364, %v362
      %v445 = vpack.c.b16 %v365, %v363
      %v446 = vpack.c.b16 %v368, %v366
      %v447 = vpack.c.b16 %v369, %v367
      %v448 = vpack.c.b16 %v372, %v370
      %v449 = vpack.c.b16 %v373, %v371
      %v450 = vpack.c.b16 %v376, %v374
      %v451 = vpack.c.b16 %v377, %v375
      %v452 = vpack.c.b16 %v380, %v378
      %v453 = vpack.c.b16 %v381, %v379
      %v454 = vpack.c.b16 %v384, %v382
      %v455 = vpack.c.b16 %v385, %v383
      %v456 = vpack.c.b16 %v388, %v386
      %v457 = vpack.c.b16 %v389, %v387
      %v458 = vpack.c.b16 %v392, %v390
      %v459 = vpack.c.b16 %v393, %v391
      %v460 = vpack.c.b16 %v396, %v394
      %v461 = vpack.c.b16 %v397, %v395
      %v462 = vpack.c.b16 %v400, %v398
      %v463 = vpack.c.b16 %v401, %v399
      %v464 = vpack.c.b16 %v404, %v402
      %v465 = vpack.c.b16 %v405, %v403
      %v466 = vpack.c.b16 %v408, %v406
      %v467 = vpack.c.b16 %v409, %v407
      %v468 = vpack.c.b16 %v412, %v410
      %v469 = vpack.c.b16 %v413, %v411
      %v470 = vpack.c.b16 %v416, %v414
      %v471 = vpack.c.b16 %v417, %v415
      %v472 = vpack.c.b16 %v420, %v418
      %v473 = vpack.c.b16 %v421, %v419
      %v474 = vpack.c.b16 %v424, %v422
      %v475 = vpack.c.b16 %v425, %v423
      %v476 = vpack.c.b16 %v428, %v426
      %v477 = vpack.c.b16 %v429, %v427
      %526 = vmatprep.subr.bf16.mxu0 %v431
      %527 = vmatpush1.bf16.xpose.msra.mxu0 %v430
      %528 = vmatprep.subr.bf16.mxu0 %v433
      %529 = vmatpush1.bf16.xpose.msra.mxu0 %v432
      %530 = vmatprep.subr.bf16.mxu0 %v435
      %531 = vmatpush1.bf16.xpose.msra.mxu0 %v434
      %532 = vmatprep.subr.bf16.mxu0 %v437
      %533 = vmatpush1.bf16.xpose.msra.mxu0 %v436
      %534 = vmatprep.subr.bf16.mxu0 %v439
      %535 = vmatpush1.bf16.xpose.msra.mxu0 %v438
      %536 = vmatprep.subr.bf16.mxu0 %v441
      %537 = vmatpush1.bf16.xpose.msra.mxu0 %v440
      %538 = vmatprep.subr.bf16.mxu0 %v443
      %539 = vmatpush1.bf16.xpose.msra.mxu0 %v442
      %540 = vmatprep.subr.bf16.mxu0 %v445
      %541 = vmatpush1.bf16.xpose.msra.mxu0 %v444
      %542 = vmatprep.subr.bf16.mxu0 %v447
      %543 = vmatpush1.bf16.xpose.msra.mxu0 %v446
      %544 = vmatprep.subr.bf16.mxu0 %v449
      %545 = vmatpush1.bf16.xpose.msra.mxu0 %v448
      %546 = vmatprep.subr.bf16.mxu0 %v451
      %547 = vmatpush1.bf16.xpose.msra.mxu0 %v450
      %548 = vmatprep.subr.bf16.mxu0 %v453
      %549 = vmatpush1.bf16.xpose.msra.mxu0 %v452
      %550 = vmatprep.subr.bf16.mxu0 %v455
      %551 = vmatpush1.bf16.xpose.msra.mxu0 %v454
      %552 = vmatprep.subr.bf16.mxu0 %v457
      %553 = vmatpush1.bf16.xpose.msra.mxu0 %v456
      %554 = vmatprep.subr.bf16.mxu0 %v459
      %555 = vmatpush1.bf16.xpose.msra.mxu0 %v458
      %556 = vmatprep.subr.bf16.mxu0 %v461
      %557 = vmatpush1.bf16.xpose.msra.mxu0 %v460
      %558 = vmatprep.mubr.bf16.mxu0 %v283
      %559 = vmatmul.mubr.bf16.gmra.mrb[0].mxu0 %v276
      %v560 = vpop.f32.mrb[0].mxu0
      %v561 = vadd.f32 %v249, %v560
      %v562 = vpop.f32.mrb[0].mxu0
      %v563 = vadd.f32 %v253, %v562
      %v564 = vpop.f32.mrb[0].mxu0
      %v565 = vpop.f32.mrb[0].mxu0
      %566 = vdwg.mxu0
      %567 = vmatprep.subr.bf16.mxu0 %v463
      %568 = vmatpush1.bf16.xpose.msra.mxu0 %v462
      %569 = vmatprep.subr.bf16.mxu0 %v465
      %570 = vmatpush1.bf16.xpose.msra.mxu0 %v464
      %571 = vmatprep.subr.bf16.mxu0 %v467
      %572 = vmatpush1.bf16.xpose.msra.mxu0 %v466
      %573 = vmatprep.subr.bf16.mxu0 %v469
      %574 = vmatpush1.bf16.xpose.msra.mxu0 %v468
      %575 = vmatprep.subr.bf16.mxu0 %v471
      %576 = vmatpush1.bf16.xpose.msra.mxu0 %v470
      %577 = vmatprep.subr.bf16.mxu0 %v473
      %578 = vmatpush1.bf16.xpose.msra.mxu0 %v472
      %579 = vmatprep.subr.bf16.mxu0 %v475
      %580 = vmatpush1.bf16.xpose.msra.mxu0 %v474
      %581 = vmatprep.subr.bf16.mxu0 %v477
      %582 = vmatpush1.bf16.xpose.msra.mxu0 %v476
      %583 = vmatprep.subr.bf16.mxu0 0
      %584 = vmatpush1.bf16.xpose.msra.mxu0 0
      %585 = vmatprep.subr.bf16.mxu0 0
      %586 = vmatpush1.bf16.xpose.msra.mxu0 0
      %587 = vmatprep.subr.bf16.mxu0 0
      %588 = vmatpush1.bf16.xpose.msra.mxu0 0
      %589 = vmatprep.subr.bf16.mxu0 0
      %590 = vmatpush1.bf16.xpose.msra.mxu0 0
      %591 = vmatprep.subr.bf16.mxu0 0
      %592 = vmatpush1.bf16.xpose.msra.mxu0 0
      %593 = vmatprep.subr.bf16.mxu0 0
      %594 = vmatpush1.bf16.xpose.msra.mxu0 0
      %595 = vmatprep.subr.bf16.mxu0 0
      %596 = vmatpush1.bf16.xpose.msra.mxu0 0
      %597 = vmatprep.subr.bf16.mxu0 0
      %598 = vmatpush1.bf16.xpose.msra.mxu0 0
      %599 = vmatprep.mubr.bf16.mxu0 %v283
      %600 = vmatmul.mubr.bf16.gmra.mrb[0].mxu0 %v276
      %v601 = vpop.f32.mrb[0].mxu0
      %v602 = vadd.f32 %v257, %v601
      %v603 = vpop.f32.mrb[0].mxu0
      %v604 = vpop.f32.mrb[0].mxu0
      %v605 = vpop.f32.mrb[0].mxu0
      %606 = vdwg.mxu0
      %v607 = vpack.c.bf16 %v561, %v561
      %v608 = vpack.c.bf16 %v563, %v563
      %v609 = vpack.c.bf16 %v602, %v602
      %v613 = vcombine.low %v607, %v608
      %v615 = vunpack.c.l.s4 1966171168
      %v616 = vunpack.c.0.s8 %v615
      %v617 = vlaneseq
      %v618 = vshrl.u32 %v617, 7
      %v619 = vsub.s32 %v616, %v618
      %v620 = vrot.slane %v613, %v619
      %v622 = vunpack.c.l.s4 1966171168
      %v623 = vunpack.c.0.s8 %v622
      %v624 = vlaneseq
      %v625 = vshrl.u32 %v624, 7
      %v626 = vsub.s32 %v623, %v625
      %v627 = vrot.slane %v609, %v626
      %v628 = vcombine.low %v620, %v627
      %v630 = vunpack.c.l.s4 1966171168
      %v631 = vunpack.c.0.s8 %v630
      %v632 = vlaneseq
      %v633 = vshrl.u32 %v632, 7
      %v634 = vsub.s32 %v631, %v633
      %v635 = vrot.slane %v628, %v634
      %637 = vst [vmem:[%s192] sm:$0x7] %v635
      %s638 = smul.u32 3, %s14
      %p639 = scmp.lt.s32.totalorder %s638, 5
      %s640 = scalar_select %p639, %s638, 5
      %s641 = scalar_lea.vmem %s3, %s640
      // Predicated region
      $region33: #{self_attention_forward.2} parent=31 // pred_check
        %p642 = pneg %p105
      $region34: #{self_attention_forward.2} parent=31 // pred_check_branch
        %644 = sbr.rel (%p642) target = $region36
      $region35: #{self_attention_forward.2} parent=31 // pred_region
        %s645 = smul.u32 3, %s14
      $region36: #{self_attention_forward.2} parent=31 // pred_fallthru
        _
    $region32: #{self_attention_forward.2} parent=5 // pred_fallthru
      _
    %p646 = scmp.le.s32.totalorder 2, %s9
    // Predicated region
    $region37: #{self_attention_forward.2} parent=5 // pred_check
      %p647 = pneg %p646
    $region38: #{self_attention_forward.2} parent=5 // pred_check_branch
      %649 = sbr.rel (%p647) target = $region40
    $region39: #{self_attention_forward.2} parent=5 // pred_region
      %s650 = ssub.s32 %s9, 2
      // Predicated region
      $region41: #{self_attention_forward.2} parent=39 // pred_check
        %p651 = pneg %p111
      $region42: #{self_attention_forward.2} parent=39 // pred_check_branch
        %653 = sbr.rel (%p651) target = $region44
      $region43: #{self_attention_forward.2} parent=39 // pred_region
        %s654 = smul.u32 3, %s15
        %p655 = scmp.lt.s32.totalorder %s654, 5
        %s656 = scalar_select %p655, %s654, 5
        %s657 = scalar_lea.vmem %s3, %s656
      $region44: #{self_attention_forward.2} parent=39 // pred_fallthru
        _
    $region40: #{self_attention_forward.2} parent=5 // pred_fallthru
      _
  $region6: #{self_attention_forward.2} parent=0 // loop_footer
    %s13 = sadd.s32 1, %s9
  $region7: #{self_attention_forward.2} parent=0 // loop_footer_branch
    %8 = sbr.rel target = $region3
  $region8: #{self_attention_forward.2} parent=0 // loop_exit
    _

// kernel: self_attention_forward.3
$region0: #{self_attention_forward.3}
  #allocation0 [shape = 'u32[]', space=smem, size = 0x4, offset = 0x4, fixed_abs, tag = 'smem constant byte address 0x4 - core index']
  #allocation1 [shape = 'u32[144,128]{1,0:T(1,128)}', space=vmem, size = 0x12000, scoped, tag = 'internal scratch']
  %s0 = inlined_call_operand.vmem [shape: bf16[2,3,4,8,8], index: 0, kind: input, shape index: {}]
  %s1 = inlined_call_operand.hbm [shape: f32[2,8,32], index: 1, kind: output, shape index: {}]
  %s2 = sld [smem:[#allocation0]]
  $region37: #{self_attention_forward.3} parent=0
    _
  %s4 = ssub.s32 1, %s2
  %s5 = scalar_select 0, %s4, %s2
  $region1: #{self_attention_forward.3} parent=0
    #allocation2 [shape = 'u8[8192]{0}', space=vmem, size = 0x2000, scoped, tag = 'output window, operand 0']
    #allocation3 [shape = 's32[2]{0}', space=sflag, size = 0x8, scoped, tag = 'scoped memory for self_attention_forward.3']
    %6 = vsyncpa [#allocation3], 0
    %s7 = scalar_lea.sflag [#allocation3], 1
    %8 = vsyncpa %s7, 0
    loop: start=0, step=1, limit=4
    $region2: #{self_attention_forward.3} parent=1 // loop_pre_header
      _
    $region3: #{self_attention_forward.3} parent=1 // loop_header
      %s10 = sphi 0, %s14
      %p11 = scmp.ge.s32.totalorder %s10, 4
      %s20 = sphi 0, %s22
      %s23 = sphi 0, %s20
      %s24 = sphi 0, %s23
      %s40 = sphi 0, %s24
      %s46 = sphi 0, %s48
      %s49 = sphi 0, %s46
      %s50 = sphi 0, %s49
      %s66 = sphi 0, %s50
    $region4: #{self_attention_forward.3} parent=1 // loop_header_branch
      %13 = sbr.rel (%p11) target = $region8
    $region5: #{self_attention_forward.3} parent=1 // loop_body
      %s15 = ssub.s32 %s10, 1
      %s16 = ssub.s32 %s10, 2
      %s17 = sadd.s32 %s10, 1
      %s18 = ssub.s32 %s10, %s17
      %p19 = scmp.eq.s32.totalorder %s18, 0
      %s21 = sadd.s32 %s20, 1
      %s22 = scalar_select %p19, %s20, %s21
      %p25 = pneg %p19
      %p26 = scmp.eq.s32.totalorder %s10, 1
      %p27 = por %p25, %p26
      %p28 = scmp.ne.s32.totalorder %s20, %s23
      %p29 = scmp.eq.s32.totalorder %s10, 0
      %p30 = por %p28, %p29
      %p31 = scmp.ne.s32.totalorder %s20, %s23
      %p32 = scmp.eq.s32.totalorder %s15, 1
      %p33 = por %p31, %p32
      %p34 = scmp.ne.s32.totalorder %s23, %s24
      %p35 = scmp.eq.s32.totalorder %s15, 0
      %p36 = por %p34, %p35
      %p37 = scmp.ne.s32.totalorder %s23, %s24
      %p38 = scmp.eq.s32.totalorder %s16, 1
      %p39 = por %p37, %p38
      %p41 = scmp.ne.s32.totalorder %s24, %s40
      %p42 = scmp.eq.s32.totalorder %s16, 0
      %p43 = por %p41, %p42
      %s44 = ssub.s32 %s10, %s17
      %p45 = scmp.eq.s32.totalorder %s44, 0
      %s47 = sadd.s32 %s46, 1
      %s48 = scalar_select %p45, %s46, %s47
      %p51 = pneg %p45
      %p52 = scmp.eq.s32.totalorder %s10, 1
      %p53 = por %p51, %p52
      %p54 = scmp.ne.s32.totalorder %s46, %s49
      %p55 = scmp.eq.s32.totalorder %s10, 0
      %p56 = por %p54, %p55
      %p57 = scmp.ne.s32.totalorder %s46, %s49
      %p58 = scmp.eq.s32.totalorder %s15, 1
      %p59 = por %p57, %p58
      %p60 = scmp.ne.s32.totalorder %s49, %s50
      %p61 = scmp.eq.s32.totalorder %s15, 0
      %p62 = por %p60, %p61
      %p63 = scmp.ne.s32.totalorder %s49, %s50
      %p64 = scmp.eq.s32.totalorder %s16, 1
      %p65 = por %p63, %p64
      %p67 = scmp.ne.s32.totalorder %s50, %s66
      %p68 = scmp.eq.s32.totalorder %s16, 0
      %p69 = por %p67, %p68
      %p70 = scmp.le.s32.totalorder 1, %s10
      %p71 = scmp.lt.s32.totalorder %s10, 3
      %p72 = pnand %p70, %p71
      %p73 = pneg %p72
      // Predicated region
      $region9: #{self_attention_forward.3} parent=5 // pred_check
        _
      $region10: #{self_attention_forward.3} parent=5 // pred_check_branch
        %75 = sbr.rel (%p72) target = $region12
      $region11: #{self_attention_forward.3} parent=5 // pred_region
        %s76 = ssub.s32 %s10, 1
      $region12: #{self_attention_forward.3} parent=5 // pred_fallthru
        _
      %p77 = scmp.lt.s32.totalorder %s10, 2
      // Predicated region
      $region13: #{self_attention_forward.3} parent=5 // pred_check
        %p78 = pneg %p77
      $region14: #{self_attention_forward.3} parent=5 // pred_check_branch
        %80 = sbr.rel (%p78) target = $region16
      $region15: #{self_attention_forward.3} parent=5 // pred_region
        // Predicated region
        $region17: #{self_attention_forward.3} parent=15 // pred_check
          %p81 = pneg %p30
        $region18: #{self_attention_forward.3} parent=15 // pred_check_branch
          %83 = sbr.rel (%p81) target = $region20
        $region19: #{self_attention_forward.3} parent=15 // pred_region
          %p84 = scmp.lt.s32.totalorder %s10, 1
          %s85 = scalar_select %p84, %s10, 1
          %s86 = smul.addr %s85, 12
          %s87 = smul.addr %s86, 4
          %s88 = scalar_lea.vmem %s0, %s87
        $region20: #{self_attention_forward.3} parent=15 // pred_fallthru
          _
      $region16: #{self_attention_forward.3} parent=5 // pred_fallthru
        _
      %p89 = scmp.le.s32.totalorder 1, %s10
      %p90 = scmp.lt.s32.totalorder %s10, 3
      %p91 = pnand %p89, %p90
      %p92 = pneg %p91
      // Predicated region
      $region21: #{self_attention_forward.3} parent=5 // pred_check
        _
      $region22: #{self_attention_forward.3} parent=5 // pred_check_branch
        %94 = sbr.rel (%p91) target = $region24
      $region23: #{self_attention_forward.3} parent=5 // pred_region
        %s95 = ssub.s32 %s10, 1
        %p96 = scmp.lt.s32.totalorder %s15, 1
        %s97 = scalar_select %p96, %s15, 1
        %s98 = smul.addr %s97, 12
        %s99 = smul.addr %s98, 4
        %s100 = scalar_lea.vmem %s0, %s99
        %p101 = pneg %p36
        %p102 = pneg %p33
        %p103 = pneg %p62
        %p104 = pneg %p59
        %s105 = sand.u32 %s49, 1
        %s106 = scalar_lea.sflag [#allocation3], %s105
        %s107 = sand.u32 %s49, 1
        %s108 = smul.addr %s107, 8
        %s109 = scalar_lea.vmem [#allocation2], %s108
        %p110 = scmp.lt.s32.totalorder %s15, 1
        %s111 = scalar_select %p110, %s15, 1
        %s112 = smul.addr %s111, 12
        %s113 = smul.addr %s112, 4
        %s114 = scalar_lea.vmem %s0, %s113
        %v116 = vld [vmem:[%s114] sm:$0xf]
        %v117 = vld [vmem:[%s114 + $0x4] sm:$0xf]
        %v118 = vld [vmem:[%s114 + $0x8] sm:$0xf]
        %v119 = vld [vmem:[%s114 + $0xc] sm:$0xf]
        %v120 = vld [vmem:[%s114 + $0x10] sm:$0xf]
        %v121 = vld [vmem:[%s114 + $0x14] sm:$0xf]
        %v122 = vld [vmem:[%s114 + $0x18] sm:$0xf]
        %v123 = vld [vmem:[%s114 + $0x1c] sm:$0xf]
        %v124 = vld [vmem:[%s114 + $0x20] sm:$0xf]
        %v125 = vld [vmem:[%s114 + $0x24] sm:$0xf]
        %v126 = vld [vmem:[%s114 + $0x28] sm:$0xf]
        %v127 = vld [vmem:[%s114 + $0x2c] sm:$0xf]
        %vm128 = vcmask 64512
        %v130 = vsel %vm128, %v116, 0
        %v133 = vsel %vm128, %v120, 0
        %135 = vmatprep.subr.bf16.mxu0 0
        %136 = vmatpush1.bf16.xpose.msra.mxu0 %v133
        %137 = vmatprep.subr.bf16.mxu0 0
        %138 = vmatpush1.bf16.xpose.msra.mxu0 0
        %139 = vmatprep.subr.bf16.mxu0 0
        %140 = vmatpush1.bf16.xpose.msra.mxu0 0
        %141 = vmatprep.subr.bf16.mxu0 0
        %142 = vmatpush1.bf16.xpose.msra.mxu0 0
        %143 = vmatprep.subr.bf16.mxu0 0
        %144 = vmatpush1.bf16.xpose.msra.mxu0 0
        %145 = vmatprep.subr.bf16.mxu0 0
        %146 = vmatpush1.bf16.xpose.msra.mxu0 0
        %147 = vmatprep.subr.bf16.mxu0 0
        %148 = vmatpush1.bf16.xpose.msra.mxu0 0
        %149 = vmatprep.subr.bf16.mxu0 0
        %150 = vmatpush1.bf16.xpose.msra.mxu0 0
        %151 = vmatprep.subr.bf16.mxu0 0
        %152 = vmatpush1.bf16.xpose.msra.mxu0 0
        %153 = vmatprep.subr.bf16.mxu0 0
        %154 = vmatpush1.bf16.xpose.msra.mxu0 0
        %155 = vmatprep.subr.bf16.mxu0 0
        %156 = vmatpush1.bf16.xpose.msra.mxu0 0
        %157 = vmatprep.subr.bf16.mxu0 0
        %158 = vmatpush1.bf16.xpose.msra.mxu0 0
        %159 = vmatprep.subr.bf16.mxu0 0
        %160 = vmatpush1.bf16.xpose.msra.mxu0 0
        %161 = vmatprep.subr.bf16.mxu0 0
        %162 = vmatpush1.bf16.xpose.msra.mxu0 0
        %163 = vmatprep.subr.bf16.mxu0 0
        %164 = vmatpush1.bf16.xpose.msra.mxu0 0
        %165 = vmatprep.subr.bf16.mxu0 0
        %166 = vmatpush1.bf16.xpose.msra.mxu0 0
        %167 = vmatprep.mubr.bf16.mxu0 0
        %168 = vmatmul.mubr.bf16.gmra.mrb[0].mxu0 %v130
        %v169 = vpop.f32.mrb[0].mxu0
        %v170 = vadd.f32 0.0, %v169
        %v171 = vpop.f32.mrb[0].mxu0
        %v172 = vpop.f32.mrb[0].mxu0
        %v173 = vpop.f32.mrb[0].mxu0
        %174 = vdwg.mxu0
        %v176 = vsel %vm128, %v117, 0
        %v179 = vsel %vm128, %v121, 0
        %181 = vmatprep.subr.bf16.mxu0 0
        %182 = vmatpush1.bf16.xpose.msra.mxu0 %v179
        %183 = vmatprep.subr.bf16.mxu0 0
        %184 = vmatpush1.bf16.xpose.msra.mxu0 0
        %185 = vmatprep.subr.bf16.mxu0 0
        %186 = vmatpush1.bf16.xpose.msra.mxu0 0
        %187 = vmatprep.subr.bf16.mxu0 0
        %188 = vmatpush1.bf16.xpose.msra.mxu0 0
        %189 = vmatprep.subr.bf16.mxu0 0
        %190 = vmatpush1.bf16.xpose.msra.mxu0 0
        %191 = vmatprep.subr.bf16.mxu0 0
        %192 = vmatpush1.bf16.xpose.msra.mxu0 0
        %193 = vmatprep.subr.bf16.mxu0 0
        %194 = vmatpush1.bf16.xpose.msra.mxu0 0
        %195 = vmatprep.subr.bf16.mxu0 0
        %196 = vmatpush1.bf16.xpose.msra.mxu0 0
        %197 = vmatprep.subr.bf16.mxu0 0
        %198 = vmatpush1.bf16.xpose.msra.mxu0 0
        %199 = vmatprep.subr.bf16.mxu0 0
        %200 = vmatpush1.bf16.xpose.msra.mxu0 0
        %201 = vmatprep.subr.bf16.mxu0 0
        %202 = vmatpush1.bf16.xpose.msra.mxu0 0
        %203 = vmatprep.subr.bf16.mxu0 0
        %204 = vmatpush1.bf16.xpose.msra.mxu0 0
        %205 = vmatprep.subr.bf16.mxu0 0
        %206 = vmatpush1.bf16.xpose.msra.mxu0 0
        %207 = vmatprep.subr.bf16.mxu0 0
        %208 = vmatpush1.bf16.xpose.msra.mxu0 0
        %209 = vmatprep.subr.bf16.mxu0 0
        %210 = vmatpush1.bf16.xpose.msra.mxu0 0
        %211 = vmatprep.subr.bf16.mxu0 0
        %212 = vmatpush1.bf16.xpose.msra.mxu0 0
        %213 = vmatprep.mubr.bf16.mxu0 0
        %214 = vmatmul.mubr.bf16.gmra.mrb[0].mxu0 %v176
        %v215 = vpop.f32.mrb[0].mxu0
        %v216 = vadd.f32 0.0, %v215
        %v217 = vpop.f32.mrb[0].mxu0
        %v218 = vpop.f32.mrb[0].mxu0
        %v219 = vpop.f32.mrb[0].mxu0
        %220 = vdwg.mxu0
        %v222 = vsel %vm128, %v118, 0
        %v225 = vsel %vm128, %v122, 0
        %227 = vmatprep.subr.bf16.mxu0 0
        %228 = vmatpush1.bf16.xpose.msra.mxu0 %v225
        %229 = vmatprep.subr.bf16.mxu0 0
        %230 = vmatpush1.bf16.xpose.msra.mxu0 0
        %231 = vmatprep.subr.bf16.mxu0 0
        %232 = vmatpush1.bf16.xpose.msra.mxu0 0
        %233 = vmatprep.subr.bf16.mxu0 0
        %234 = vmatpush1.bf16.xpose.msra.mxu0 0
        %235 = vmatprep.subr.bf16.mxu0 0
        %236 = vmatpush1.bf16.xpose.msra.mxu0 0
        %237 = vmatprep.subr.bf16.mxu0 0
        %238 = vmatpush1.bf16.xpose.msra.mxu0 0
        %239 = vmatprep.subr.bf16.mxu0 0
        %240 = vmatpush1.bf16.xpose.msra.mxu0 0
        %241 = vmatprep.subr.bf16.mxu0 0
        %242 = vmatpush1.bf16.xpose.msra.mxu0 0
        %243 = vmatprep.subr.bf16.mxu0 0
        %244 = vmatpush1.bf16.xpose.msra.mxu0 0
        %245 = vmatprep.subr.bf16.mxu0 0
        %246 = vmatpush1.bf16.xpose.msra.mxu0 0
        %247 = vmatprep.subr.bf16.mxu0 0
        %248 = vmatpush1.bf16.xpose.msra.mxu0 0
        %249 = vmatprep.subr.bf16.mxu0 0
        %250 = vmatpush1.bf16.xpose.msra.mxu0 0
        %251 = vmatprep.subr.bf16.mxu0 0
        %252 = vmatpush1.bf16.xpose.msra.mxu0 0
        %253 = vmatprep.subr.bf16.mxu0 0
        %254 = vmatpush1.bf16.xpose.msra.mxu0 0
        %255 = vmatprep.subr.bf16.mxu0 0
        %256 = vmatpush1.bf16.xpose.msra.mxu0 0
        %257 = vmatprep.subr.bf16.mxu0 0
        %258 = vmatpush1.bf16.xpose.msra.mxu0 0
        %259 = vmatprep.mubr.bf16.mxu0 0
        %260 = vmatmul.mubr.bf16.gmra.mrb[0].mxu0 %v222
        %v261 = vpop.f32.mrb[0].mxu0
        %v262 = vadd.f32 0.0, %v261
        %v263 = vpop.f32.mrb[0].mxu0
        %v264 = vpop.f32.mrb[0].mxu0
        %v265 = vpop.f32.mrb[0].mxu0
        %266 = vdwg.mxu0
        %v268 = vsel %vm128, %v119, 0
        %v271 = vsel %vm128, %v123, 0
        %273 = vmatprep.subr.bf16.mxu0 0
        %274 = vmatpush1.bf16.xpose.msra.mxu0 %v271
        %275 = vmatprep.subr.bf16.mxu0 0
        %276 = vmatpush1.bf16.xpose.msra.mxu0 0
        %277 = vmatprep.subr.bf16.mxu0 0
        %278 = vmatpush1.bf16.xpose.msra.mxu0 0
        %279 = vmatprep.subr.bf16.mxu0 0
        %280 = vmatpush1.bf16.xpose.msra.mxu0 0
        %281 = vmatprep.subr.bf16.mxu0 0
        %282 = vmatpush1.bf16.xpose.msra.mxu0 0
        %283 = vmatprep.subr.bf16.mxu0 0
        %284 = vmatpush1.bf16.xpose.msra.mxu0 0
        %285 = vmatprep.subr.bf16.mxu0 0
        %286 = vmatpush1.bf16.xpose.msra.mxu0 0
        %287 = vmatprep.subr.bf16.mxu0 0
        %288 = vmatpush1.bf16.xpose.msra.mxu0 0
        %289 = vmatprep.subr.bf16.mxu0 0
        %290 = vmatpush1.bf16.xpose.msra.mxu0 0
        %291 = vmatprep.subr.bf16.mxu0 0
        %292 = vmatpush1.bf16.xpose.msra.mxu0 0
        %293 = vmatprep.subr.bf16.mxu0 0
        %294 = vmatpush1.bf16.xpose.msra.mxu0 0
        %295 = vmatprep.subr.bf16.mxu0 0
        %296 = vmatpush1.bf16.xpose.msra.mxu0 0
        %297 = vmatprep.subr.bf16.mxu0 0
        %298 = vmatpush1.bf16.xpose.msra.mxu0 0
        %299 = vmatprep.subr.bf16.mxu0 0
        %300 = vmatpush1.bf16.xpose.msra.mxu0 0
        %301 = vmatprep.subr.bf16.mxu0 0
        %302 = vmatpush1.bf16.xpose.msra.mxu0 0
        %303 = vmatprep.subr.bf16.mxu0 0
        %304 = vmatpush1.bf16.xpose.msra.mxu0 0
        %305 = vmatprep.mubr.bf16.mxu0 0
        %306 = vmatmul.mubr.bf16.gmra.mrb[0].mxu0 %v268
        %v307 = vpop.f32.mrb[0].mxu0
        %v308 = vadd.f32 0.0, %v307
        %v309 = vpop.f32.mrb[0].mxu0
        %v310 = vpop.f32.mrb[0].mxu0
        %v311 = vpop.f32.mrb[0].mxu0
        %312 = vdwg.mxu0
        %v313 = vsel %vm128, %v170, -inf
        %314 = vmax.xlane.f32.xlu0 %v313
        %v315 = vpop.xlane.xlu0 %314
        %v316 = vsel %vm128, %v216, -inf
        %317 = vmax.xlane.f32.xlu0 %v316
        %v318 = vpop.xlane.xlu0 %317
        %v319 = vsel %vm128, %v262, -inf
        %320 = vmax.xlane.f32.xlu0 %v319
        %v321 = vpop.xlane.xlu0 %320
        %v322 = vsel %vm128, %v308, -inf
        %323 = vmax.xlane.f32.xlu0 %v322
        %v324 = vpop.xlane.xlu0 %323
        %v325 = vsub.f32 %v170, %v315
        %v326 = vsub.f32 %v216, %v318
        %v327 = vsub.f32 %v262, %v321
        %v328 = vsub.f32 %v308, %v324
        %v329 = vmul.f32 %v325, 1.442695
        %v330 = vpow.pop %v329
        %v331 = vmul.f32 %v326, 1.442695
        %v332 = vpow.pop %v331
        %v333 = vmul.f32 %v327, 1.442695
        %v334 = vpow.pop %v333
        %v335 = vmul.f32 %v328, 1.442695
        %v336 = vpow.pop %v335
        %v337 = vsel %vm128, %v330, 0.0
        %338 = vadd.xlane.f32.xlu0 %v337
        %v339 = vpop.xlane.xlu0 %338
        %v340 = vsel %vm128, %v332, 0.0
        %341 = vadd.xlane.f32.xlu0 %v340
        %v342 = vpop.xlane.xlu0 %341
        %v343 = vsel %vm128, %v334, 0.0
        %344 = vadd.xlane.f32.xlu0 %v343
        %v345 = vpop.xlane.xlu0 %344
        %v346 = vsel %vm128, %v336, 0.0
        %347 = vadd.xlane.f32.xlu0 %v346
        %v348 = vpop.xlane.xlu0 %347
        %v349 = vpack.c.bf16 %v330, %v330
        %v350 = vpack.c.bf16 %v332, %v332
        %v351 = vpack.c.bf16 %v334, %v334
        %v352 = vpack.c.bf16 %v336, %v336
        %v354 = vsel %vm128, %v349, 0
        %vm356 = vcmask 1043456
        %v358 = vsel %vm356, %v124, 0
        %360 = vmatprep.subr.bf16.mxu0 0
        %361 = vmatpush1.bf16.msra.mxu0 %v358
        %362 = vmatprep.subr.bf16.mxu0 0
        %363 = vmatpush1.bf16.msra.mxu0 0
        %364 = vmatprep.subr.bf16.mxu0 0
        %365 = vmatpush1.bf16.msra.mxu0 0
        %366 = vmatprep.subr.bf16.mxu0 0
        %367 = vmatpush1.bf16.msra.mxu0 0
        %368 = vmatprep.subr.bf16.mxu0 0
        %369 = vmatpush1.bf16.msra.mxu0 0
        %370 = vmatprep.subr.bf16.mxu0 0
        %371 = vmatpush1.bf16.msra.mxu0 0
        %372 = vmatprep.subr.bf16.mxu0 0
        %373 = vmatpush1.bf16.msra.mxu0 0
        %374 = vmatprep.subr.bf16.mxu0 0
        %375 = vmatpush1.bf16.msra.mxu0 0
        %376 = vmatprep.subr.bf16.mxu0 0
        %377 = vmatpush1.bf16.msra.mxu0 0
        %378 = vmatprep.subr.bf16.mxu0 0
        %379 = vmatpush1.bf16.msra.mxu0 0
        %380 = vmatprep.subr.bf16.mxu0 0
        %381 = vmatpush1.bf16.msra.mxu0 0
        %382 = vmatprep.subr.bf16.mxu0 0
        %383 = vmatpush1.bf16.msra.mxu0 0
        %384 = vmatprep.subr.bf16.mxu0 0
        %385 = vmatpush1.bf16.msra.mxu0 0
        %386 = vmatprep.subr.bf16.mxu0 0
        %387 = vmatpush1.bf16.msra.mxu0 0
        %388 = vmatprep.subr.bf16.mxu0 0
        %389 = vmatpush1.bf16.msra.mxu0 0
        %390 = vmatprep.subr.bf16.mxu0 0
        %391 = vmatpush1.bf16.msra.mxu0 0
        %392 = vmatprep.mubr.bf16.mxu0 0
        %393 = vmatmul.mubr.bf16.gmra.mrb[0].mxu0 %v354
        %v394 = vpop.f32.mrb[0].mxu0
        %v395 = vadd.f32 0.0, %v394
        %v396 = vpop.f32.mrb[0].mxu0
        %v397 = vpop.f32.mrb[0].mxu0
        %v398 = vpop.f32.mrb[0].mxu0
        %399 = vdwg.mxu0
        %v401 = vsel %vm128, %v350, 0
        %v404 = vsel %vm356, %v125, 0
        %406 = vmatprep.subr.bf16.mxu0 0
        %407 = vmatpush1.bf16.msra.mxu0 %v404
        %408 = vmatprep.subr.bf16.mxu0 0
        %409 = vmatpush1.bf16.msra.mxu0 0
        %410 = vmatprep.subr.bf16.mxu0 0
        %411 = vmatpush1.bf16.msra.mxu0 0
        %412 = vmatprep.subr.bf16.mxu0 0
        %413 = vmatpush1.bf16.msra.mxu0 0
        %414 = vmatprep.subr.bf16.mxu0 0
        %415 = vmatpush1.bf16.msra.mxu0 0
        %416 = vmatprep.subr.bf16.mxu0 0
        %417 = vmatpush1.bf16.msra.mxu0 0
        %418 = vmatprep.subr.bf16.mxu0 0
        %419 = vmatpush1.bf16.msra.mxu0 0
        %420 = vmatprep.subr.bf16.mxu0 0
        %421 = vmatpush1.bf16.msra.mxu0 0
        %422 = vmatprep.subr.bf16.mxu0 0
        %423 = vmatpush1.bf16.msra.mxu0 0
        %424 = vmatprep.subr.bf16.mxu0 0
        %425 = vmatpush1.bf16.msra.mxu0 0
        %426 = vmatprep.subr.bf16.mxu0 0
        %427 = vmatpush1.bf16.msra.mxu0 0
        %428 = vmatprep.subr.bf16.mxu0 0
        %429 = vmatpush1.bf16.msra.mxu0 0
        %430 = vmatprep.subr.bf16.mxu0 0
        %431 = vmatpush1.bf16.msra.mxu0 0
        %432 = vmatprep.subr.bf16.mxu0 0
        %433 = vmatpush1.bf16.msra.mxu0 0
        %434 = vmatprep.subr.bf16.mxu0 0
        %435 = vmatpush1.bf16.msra.mxu0 0
        %436 = vmatprep.subr.bf16.mxu0 0
        %437 = vmatpush1.bf16.msra.mxu0 0
        %438 = vmatprep.mubr.bf16.mxu0 0
        %439 = vmatmul.mubr.bf16.gmra.mrb[0].mxu0 %v401
        %v440 = vpop.f32.mrb[0].mxu0
        %v441 = vadd.f32 0.0, %v440
        %v442 = vpop.f32.mrb[0].mxu0
        %v443 = vpop.f32.mrb[0].mxu0
        %v444 = vpop.f32.mrb[0].mxu0
        %445 = vdwg.mxu0
        %v447 = vsel %vm128, %v351, 0
        %v450 = vsel %vm356, %v126, 0
        %452 = vmatprep.subr.bf16.mxu0 0
        %453 = vmatpush1.bf16.msra.mxu0 %v450
        %454 = vmatprep.subr.bf16.mxu0 0
        %455 = vmatpush1.bf16.msra.mxu0 0
        %456 = vmatprep.subr.bf16.mxu0 0
        %457 = vmatpush1.bf16.msra.mxu0 0
        %458 = vmatprep.subr.bf16.mxu0 0
        %459 = vmatpush1.bf16.msra.mxu0 0
        %460 = vmatprep.subr.bf16.mxu0 0
        %461 = vmatpush1.bf16.msra.mxu0 0
        %462 = vmatprep.subr.bf16.mxu0 0
        %463 = vmatpush1.bf16.msra.mxu0 0
        %464 = vmatprep.subr.bf16.mxu0 0
        %465 = vmatpush1.bf16.msra.mxu0 0
        %466 = vmatprep.subr.bf16.mxu0 0
        %467 = vmatpush1.bf16.msra.mxu0 0
        %468 = vmatprep.subr.bf16.mxu0 0
        %469 = vmatpush1.bf16.msra.mxu0 0
        %470 = vmatprep.subr.bf16.mxu0 0
        %471 = vmatpush1.bf16.msra.mxu0 0
        %472 = vmatprep.subr.bf16.mxu0 0
        %473 = vmatpush1.bf16.msra.mxu0 0
        %474 = vmatprep.subr.bf16.mxu0 0
        %475 = vmatpush1.bf16.msra.mxu0 0
        %476 = vmatprep.subr.bf16.mxu0 0
        %477 = vmatpush1.bf16.msra.mxu0 0
        %478 = vmatprep.subr.bf16.mxu0 0
        %479 = vmatpush1.bf16.msra.mxu0 0
        %480 = vmatprep.subr.bf16.mxu0 0
        %481 = vmatpush1.bf16.msra.mxu0 0
        %482 = vmatprep.subr.bf16.mxu0 0
        %483 = vmatpush1.bf16.msra.mxu0 0
        %484 = vmatprep.mubr.bf16.mxu0 0
        %485 = vmatmul.mubr.bf16.gmra.mrb[0].mxu0 %v447
        %v486 = vpop.f32.mrb[0].mxu0
        %v487 = vadd.f32 0.0, %v486
        %v488 = vpop.f32.mrb[0].mxu0
        %v489 = vpop.f32.mrb[0].mxu0
        %v490 = vpop.f32.mrb[0].mxu0
        %491 = vdwg.mxu0
        %v493 = vsel %vm128, %v352, 0
        %v496 = vsel %vm356, %v127, 0
        %498 = vmatprep.subr.bf16.mxu0 0
        %499 = vmatpush1.bf16.msra.mxu0 %v496
        %500 = vmatprep.subr.bf16.mxu0 0
        %501 = vmatpush1.bf16.msra.mxu0 0
        %502 = vmatprep.subr.bf16.mxu0 0
        %503 = vmatpush1.bf16.msra.mxu0 0
        %504 = vmatprep.subr.bf16.mxu0 0
        %505 = vmatpush1.bf16.msra.mxu0 0
        %506 = vmatprep.subr.bf16.mxu0 0
        %507 = vmatpush1.bf16.msra.mxu0 0
        %508 = vmatprep.subr.bf16.mxu0 0
        %509 = vmatpush1.bf16.msra.mxu0 0
        %510 = vmatprep.subr.bf16.mxu0 0
        %511 = vmatpush1.bf16.msra.mxu0 0
        %512 = vmatprep.subr.bf16.mxu0 0
        %513 = vmatpush1.bf16.msra.mxu0 0
        %514 = vmatprep.subr.bf16.mxu0 0
        %515 = vmatpush1.bf16.msra.mxu0 0
        %516 = vmatprep.subr.bf16.mxu0 0
        %517 = vmatpush1.bf16.msra.mxu0 0
        %518 = vmatprep.subr.bf16.mxu0 0
        %519 = vmatpush1.bf16.msra.mxu0 0
        %520 = vmatprep.subr.bf16.mxu0 0
        %521 = vmatpush1.bf16.msra.mxu0 0
        %522 = vmatprep.subr.bf16.mxu0 0
        %523 = vmatpush1.bf16.msra.mxu0 0
        %524 = vmatprep.subr.bf16.mxu0 0
        %525 = vmatpush1.bf16.msra.mxu0 0
        %526 = vmatprep.subr.bf16.mxu0 0
        %527 = vmatpush1.bf16.msra.mxu0 0
        %528 = vmatprep.subr.bf16.mxu0 0
        %529 = vmatpush1.bf16.msra.mxu0 0
        %530 = vmatprep.mubr.bf16.mxu0 0
        %531 = vmatmul.mubr.bf16.gmra.mrb[0].mxu0 %v493
        %v532 = vpop.f32.mrb[0].mxu0
        %v533 = vadd.f32 0.0, %v532
        %v534 = vpop.f32.mrb[0].mxu0
        %v535 = vpop.f32.mrb[0].mxu0
        %v536 = vpop.f32.mrb[0].mxu0
        %537 = vdwg.mxu0
        %v538 = vrcp.pop %v339
        %v539 = vrcp.pop %v342
        %v540 = vrcp.pop %v345
        %v541 = vrcp.pop %v348
        %v542 = vmul.f32 %v538, 0.35355338
        %v543 = vmul.f32 %v539, 0.35355338
        %v544 = vmul.f32 %v540, 0.35355338
        %v545 = vmul.f32 %v541, 0.35355338
        %v546 = vmul.f32 %v395, %v542
        %v547 = vmul.f32 %v441, %v543
        %v548 = vmul.f32 %v487, %v544
        %v549 = vmul.f32 %v533, %v545
        %551 = vrot.lane.b32.xlu0 %v547, 8
        %v552 = vpop.permute.xlu0 %551
        %555 = vrot.lane.b32.xlu0 %v548, 16
        %v556 = vpop.permute.xlu0 %555
        %559 = vrot.lane.b32.xlu0 %v549, 24
        %v560 = vpop.permute.xlu0 %559
        %v562 = vsel %vm128, %v546, %v552
        %vm563 = vcmask 130048
        %v564 = vsel %vm563, %v562, %v556
        %vm565 = vcmask 195584
        %v566 = vsel %vm565, %v564, %v560
        %vm567 = vcmask 261120
        %568 = vst.msk [vmem:[%s109] sm:$0xff] %vm567, %v566
        %s569 = sand.u32 %s49, 1
        %s570 = scalar_lea.sflag [#allocation3], %s569
        %s571 = sand.u32 %s49, 1
        %s572 = smul.addr %s571, 8
        %s573 = scalar_lea.vmem [#allocation2], %s572
        // Predicated region
        $region25: #{self_attention_forward.3} parent=23 // pred_check
          %p574 = pneg %p59
        $region26: #{self_attention_forward.3} parent=23 // pred_check_branch
          %576 = sbr.rel (%p574) target = $region28
        $region27: #{self_attention_forward.3} parent=23 // pred_region
          %s578 = ssub.s32 128, 128
          %579 = vsyncadd %s570, %s578
          %s580 = smul.addr %s15, 128
          %s581 = scalar_lea.hbm %s1, %s580
          %s583 = sshll.u32 %s573, 4
          %s584 = int_to_ptr.vmem [resolvable:$true] %s583
          %586 = dma.vmem_to_hbm [thread:$0]  %s584, 128, %s581, %s570
        $region28: #{self_attention_forward.3} parent=23 // pred_fallthru
          _
      $region24: #{self_attention_forward.3} parent=5 // pred_fallthru
        _
      %p587 = scmp.le.s32.totalorder 2, %s10
      // Predicated region
      $region29: #{self_attention_forward.3} parent=5 // pred_check
        %p588 = pneg %p587
      $region30: #{self_attention_forward.3} parent=5 // pred_check_branch
        %590 = sbr.rel (%p588) target = $region32
      $region31: #{self_attention_forward.3} parent=5 // pred_region
        %s591 = ssub.s32 %s10, 2
        // Predicated region
        $region33: #{self_attention_forward.3} parent=31 // pred_check
          %p592 = pneg %p65
        $region34: #{self_attention_forward.3} parent=31 // pred_check_branch
          %594 = sbr.rel (%p592) target = $region36
        $region35: #{self_attention_forward.3} parent=31 // pred_region
          %s595 = sand.u32 %s50, 1
          %s596 = scalar_lea.sflag [#allocation3], %s595
          %s597 = sand.u32 %s50, 1
          %s598 = smul.addr %s597, 8
          %s599 = scalar_lea.vmem [#allocation2], %s598
          %600 = dma.done %s596, 128
        $region36: #{self_attention_forward.3} parent=31 // pred_fallthru
          _
      $region32: #{self_attention_forward.3} parent=5 // pred_fallthru
        _
    $region6: #{self_attention_forward.3} parent=1 // loop_footer
      %s14 = sadd.s32 1, %s10
    $region7: #{self_attention_forward.3} parent=1 // loop_footer_branch
      %9 = sbr.rel target = $region3
    $region8: #{self_attention_forward.3} parent=1 // loop_exit
      _
    %601 = vsyncpa [#allocation3], 1
    %s602 = scalar_lea.sflag [#allocation3], 1
    %603 = vsyncpa %s602, 1

</llo_original>
